<compile_context>
chip_gen: v7x
topology: tpu7x:2x2x1
jax: 0.10.0
libtpu: 0.0.40
codegen_flags: <defaults>
</compile_context>

<pallas_src>
import functools

import jax
import jax.numpy as jnp
from jax.experimental import pallas as pl
from jax.experimental.pallas import tpu as pltpu


def _cond_entropy_block_kernel(logit_ref, target_ref, partial_ref, *, n_rows, tile_n):
    i = pl.program_id(0)

    logit = logit_ref[...].astype(jnp.float32)    # (tile_n, C)
    target = target_ref[...].astype(jnp.float32)  # (tile_n, C)

    # softmax(target) pieces (numerically stable); normalization folded below.
    t_max = jnp.max(target, axis=1, keepdims=True)
    t_exp = jnp.exp(target - t_max)                                   # reused twice
    t_sum = jnp.sum(t_exp, axis=1, keepdims=True)                     # (tile_n, 1)

    # log_softmax(logit) pieces.
    l_max = jnp.max(logit, axis=1, keepdims=True)
    l_lse = jnp.log(jnp.sum(jnp.exp(logit - l_max), axis=1, keepdims=True))

    # x = LSE(logit) - E_{softmax(target)}[logit]
    #   = l_lse - (sum(logit * t_exp, 1) - l_max * t_sum) / t_sum
    # (avoids materializing l_shift = logit - l_max as a second reused tile)
    num = jnp.sum(logit * t_exp, axis=1, keepdims=True) - l_max * t_sum
    x = l_lse - num * pl.reciprocal(t_sum, approx=False)              # (tile_n, 1)

    # Mask rows past the true batch size (ragged last tile) with a *select*;
    # any inf/NaN produced by garbage rows in the padded region never propagates.
    row_ids = i * tile_n + jax.lax.broadcasted_iota(jnp.int32, x.shape, 0)
    x = jnp.where(row_ids < n_rows, x, 0.0)

    # Lane-dense (1, 8, 128) output tile: block sum in [0, 0, 0], zeros elsewhere.
    # Store is an unmasked vst; the wrapper's final reduction is a dense sum and
    # stays exact (zeros contribute nothing).
    block_sum = jnp.sum(x)
    sub = jax.lax.broadcasted_iota(jnp.int32, partial_ref.shape, 1)
    lane = jax.lax.broadcasted_iota(jnp.int32, partial_ref.shape, 2)
    partial_ref[...] = jnp.where((sub == 0) & (lane == 0), block_sum, 0.0)


def _round_up(x, m):
    return ((x + m - 1) // m) * m


# VMEM accounting model (per perf review):
#   inputs:       2 tensors x 2 pipeline buffers x tile_n * C * itemsize
#   f32 temps:    ~4 full tiles (upcast logit, upcast target, t_exp, logit*t_exp)
_F32_TEMPS = 4
_VMEM_LIMIT_BYTES = 48 * 1024 * 1024          # safe on v5e/v6e (128 MiB) and v7x (64 MiB)
_VMEM_WORKING_SET_BUDGET = 40 * 1024 * 1024   # headroom under the 48 MiB limit
_INPUT_BLOCK_CAP_BYTES = 4 * 1024 * 1024      # per-input HBM block cap


def _choose_tile_n(n, c, itemsize):
    """Pick batch-tile rows from the full f32 working set, not just input bytes."""
    bytes_per_row = 4 * c * itemsize + _F32_TEMPS * c * 4
    if 8 * bytes_per_row > _VMEM_WORKING_SET_BUDGET:
        # TODO(synk): for vocab-scale C add an inner 'arbitrary' grid axis over C
        # with online max/sum rescaling instead of failing here.
        raise NotImplementedError(
            f"C={c} is too large for a single-pass class reduction "
            f"({8 * bytes_per_row} bytes of VMEM at the minimum 8-row tile).")
    rows_vmem = _VMEM_WORKING_SET_BUDGET // bytes_per_row
    rows_block = _INPUT_BLOCK_CAP_BYTES // max(c * itemsize, 1)
    tile_n = max(8, min(rows_vmem, rows_block) // 8 * 8)
    tile_n = int(min(tile_n, _round_up(n, 8)))
    # v7x: 2 TensorCores shard the 'parallel' grid axis -> aim for >= 2 blocks,
    # and (best effort, never below 8 rows) an even block count.
    if n > 8:
        tile_n = int(min(tile_n, _round_up(pl.cdiv(n, 2), 8)))
        nb = pl.cdiv(n, tile_n)
        if nb > 1 and nb % 2 == 1:
            cand = max(8, _round_up(pl.cdiv(n, nb + 1), 8))
            if pl.cdiv(n, cand) % 2 == 0:
                tile_n = int(cand)
    return tile_n


def cond_entropy_loss(logit, target, *, tile_n=None):
    """Pallas equivalent of CondEntropyLoss(reduction='mean')(logit, target).

    Inputs may be any float dtype (bf16 recommended where the producer allows:
    the kernel is HBM-bound at f32 on v5e/v6e, so halving bytes is ~2x there);
    all math is done in f32 in-kernel and a float32 scalar is returned.
    """
    assert logit.shape == target.shape and logit.ndim == 2
    n, c = logit.shape
    itemsize = jnp.dtype(logit.dtype).itemsize

    if tile_n is None:
        tile_n = _choose_tile_n(n, c, itemsize)

    num_blocks = pl.cdiv(n, tile_n)

    kernel = functools.partial(_cond_entropy_block_kernel, n_rows=n, tile_n=tile_n)

    cost = pl.CostEstimate(
        flops=8 * n * c,
        transcendentals=2 * n * c + 2 * n,
        bytes_accessed=2 * n * c * itemsize + num_blocks * 8 * 128 * 4,
    )

    partials = pl.pallas_call(
        kernel,
        out_shape=jax.ShapeDtypeStruct((num_blocks, 8, 128), jnp.float32),
        grid=(num_blocks,),
        in_specs=[
            pl.BlockSpec((tile_n, c), lambda i: (i, 0)),
            pl.BlockSpec((tile_n, c), lambda i: (i, 0)),
        ],
        out_specs=pl.BlockSpec((1, 8, 128), lambda i: (i, 0, 0)),
        compiler_params=pltpu.CompilerParams(
            dimension_semantics=("parallel",),
            vmem_limit_bytes=_VMEM_LIMIT_BYTES,
        ),
        cost_estimate=cost,
    )(logit, target)

    # Dense epilogue sum (no strided gather); exact because every non-[0,0,0]
    # element of each block tile is zero. Divide by the true batch size once.
    return jnp.sum(partials) / jnp.float32(n)


def _reference(logit, target):
    target_p = jax.nn.softmax(target.astype(jnp.float32), axis=1)
    logit_lp = jax.nn.log_softmax(logit.astype(jnp.float32), axis=1)
    x = -jnp.sum(logit_lp * target_p, axis=1)
    return jnp.mean(x, axis=0)


if __name__ == "__main__":
    key = jax.random.PRNGKey(0)
    k1, k2, k3, k4 = jax.random.split(key, 4)

    # Small shapes consistent with the module: batch=8, classes=32.
    N, C = 8, 32
    logit = jax.random.normal(k1, (N, C), dtype=jnp.float32)
    target = jax.random.normal(k2, (N, C), dtype=jnp.float32)

    loss = cond_entropy_loss(logit, target)
    jax.block_until_ready(loss)
    ref = _reference(logit, target)
    assert jnp.allclose(loss, ref, atol=1e-5, rtol=1e-5), (loss, ref)

    # Multi-block + ragged-last-tile path (N not divisible by tile_n).
    N2, C2 = 44, 160
    logit2 = jax.random.normal(k3, (N2, C2), dtype=jnp.float32)
    target2 = jax.random.normal(k4, (N2, C2), dtype=jnp.float32)
    loss2 = cond_entropy_loss(logit2, target2, tile_n=16)
    jax.block_until_ready(loss2)
    ref2 = _reference(logit2, target2)
    assert jnp.allclose(loss2, ref2, atol=2e-5, rtol=1e-5), (loss2, ref2)

    # Same shapes through the automatic (working-set-based) tile heuristic.
    loss2_auto = cond_entropy_loss(logit2, target2)
    jax.block_until_ready(loss2_auto)
    assert jnp.allclose(loss2_auto, ref2, atol=2e-5, rtol=1e-5), (loss2_auto, ref2)

    # bf16 inputs (half the HBM traffic); math still done in f32 in-kernel.
    loss_bf16 = cond_entropy_loss(logit2.astype(jnp.bfloat16),
                                  target2.astype(jnp.bfloat16), tile_n=16)
    jax.block_until_ready(loss_bf16)
    ref_bf16 = _reference(logit2.astype(jnp.bfloat16), target2.astype(jnp.bfloat16))
    assert jnp.allclose(loss_bf16, ref_bf16, atol=1e-4, rtol=1e-4), (loss_bf16, ref_bf16)

    print("KERNEL_OK")
</pallas_src>

<mosaic_0001>
module attributes {stable_mosaic.version = 11 : i64} {
  func.func @_cond_entropy_block_kernel(%arg0: i32, %arg1: memref<8x32xf32, #tpu.memory_space<vmem>>, %arg2: memref<8x32xf32, #tpu.memory_space<vmem>>, %arg3: memref<1x8x128xf32, #tpu.memory_space<vmem>>) attributes {dimension_semantics = [#tpu.dimension_semantics<parallel>], iteration_bounds = array<i64: 1>, scalar_prefetch = 0 : i64, scratch_operands = 0 : i64, tpu.core_type = #tpu.core_type<tc>, window_params = [{transform_indices = @transform_0, window_bounds = array<i64: 8, 32>}, {transform_indices = @transform_1, window_bounds = array<i64: 8, 32>}, {transform_indices = @transform_2, window_bounds = array<i64: 1, 8, 128>}]} {
    %c0 = arith.constant 0 : index
    %c0_0 = arith.constant 0 : index
    %0 = vector.load %arg1[%c0, %c0_0] : memref<8x32xf32, #tpu.memory_space<vmem>>, vector<8x32xf32>
    %c0_1 = arith.constant 0 : index
    %c0_2 = arith.constant 0 : index
    %1 = vector.load %arg2[%c0_1, %c0_2] : memref<8x32xf32, #tpu.memory_space<vmem>>, vector<8x32xf32>
    %cst = arith.constant dense<0xFF800000> : vector<8xf32>
    %2 = vector.multi_reduction <maximumf>, %1, %cst [1] : vector<8x32xf32> to vector<8xf32>
    %3 = vector.shape_cast %2 : vector<8xf32> to vector<8x1xf32>
    %4 = vector.broadcast %3 : vector<8x1xf32> to vector<8x32xf32>
    %5 = arith.subf %1, %4 : vector<8x32xf32>
    %6 = math.exp %5 : vector<8x32xf32>
    %cst_3 = arith.constant dense<0.000000e+00> : vector<8xf32>
    %7 = vector.multi_reduction <add>, %6, %cst_3 [1] : vector<8x32xf32> to vector<8xf32>
    %8 = vector.shape_cast %7 : vector<8xf32> to vector<8x1xf32>
    %cst_4 = arith.constant dense<0xFF800000> : vector<8xf32>
    %9 = vector.multi_reduction <maximumf>, %0, %cst_4 [1] : vector<8x32xf32> to vector<8xf32>
    %10 = vector.shape_cast %9 : vector<8xf32> to vector<8x1xf32>
    %11 = vector.broadcast %10 : vector<8x1xf32> to vector<8x32xf32>
    %12 = arith.subf %0, %11 : vector<8x32xf32>
    %13 = math.exp %12 : vector<8x32xf32>
    %cst_5 = arith.constant dense<0.000000e+00> : vector<8xf32>
    %14 = vector.multi_reduction <add>, %13, %cst_5 [1] : vector<8x32xf32> to vector<8xf32>
    %15 = vector.shape_cast %14 : vector<8xf32> to vector<8x1xf32>
    %16 = math.log %15 : vector<8x1xf32>
    %17 = arith.mulf %0, %6 : vector<8x32xf32>
    %cst_6 = arith.constant dense<0.000000e+00> : vector<8xf32>
    %18 = vector.multi_reduction <add>, %17, %cst_6 [1] : vector<8x32xf32> to vector<8xf32>
    %19 = vector.shape_cast %18 : vector<8xf32> to vector<8x1xf32>
    %20 = arith.mulf %10, %8 : vector<8x1xf32>
    %21 = arith.subf %19, %20 : vector<8x1xf32>
    %22 = tpu.reciprocal %8 : vector<8x1xf32> -> vector<8x1xf32>
    %23 = arith.mulf %21, %22 : vector<8x1xf32>
    %24 = arith.subf %16, %23 : vector<8x1xf32>
    %c8_i32 = arith.constant 8 : i32
    %25 = arith.muli %arg0, %c8_i32 : i32
    %26 = tpu.iota {dimensions = array<i32: 0>} : vector<8x1xi32>
    %27 = vector.broadcast %25 : i32 to vector<8x1xi32>
    %28 = arith.addi %27, %26 : vector<8x1xi32>
    %c8_i32_7 = arith.constant 8 : i32
    %29 = vector.broadcast %c8_i32_7 : i32 to vector<8x1xi32>
    %30 = arith.cmpi slt, %28, %29 : vector<8x1xi32>
    %cst_8 = arith.constant 0.000000e+00 : f32
    %31 = vector.broadcast %cst_8 : f32 to vector<8x1xf32>
    %32 = arith.select %30, %24, %31 : vector<8x1xi1>, vector<8x1xf32>
    %33 = vector.shape_cast %32 : vector<8x1xf32> to vector<1x8x1xf32>
    %cst_9 = arith.constant dense<0.000000e+00> : vector<1xf32>
    %34 = vector.multi_reduction <add>, %33, %cst_9 [1, 2] : vector<1x8x1xf32> to vector<1xf32>
    %35 = vector.shape_cast %34 : vector<1xf32> to vector<1x1x1xf32>
    %36 = vector.extract %35[0, 0, 0] : f32 from vector<1x1x1xf32>
    %37 = tpu.iota {dimensions = array<i32: 1>} : vector<1x8x128xi32>
    %38 = tpu.iota {dimensions = array<i32: 2>} : vector<1x8x128xi32>
    %c0_i32 = arith.constant 0 : i32
    %39 = vector.broadcast %c0_i32 : i32 to vector<1x8x128xi32>
    %40 = arith.cmpi eq, %37, %39 : vector<1x8x128xi32>
    %c0_i32_10 = arith.constant 0 : i32
    %41 = vector.broadcast %c0_i32_10 : i32 to vector<1x8x128xi32>
    %42 = arith.cmpi eq, %38, %41 : vector<1x8x128xi32>
    %43 = arith.andi %40, %42 : vector<1x8x128xi1>
    %cst_11 = arith.constant 0.000000e+00 : f32
    %44 = vector.broadcast %36 : f32 to vector<1x8x128xf32>
    %45 = vector.broadcast %cst_11 : f32 to vector<1x8x128xf32>
    %46 = arith.select %43, %44, %45 : vector<1x8x128xi1>, vector<1x8x128xf32>
    %c0_12 = arith.constant 0 : index
    %c0_13 = arith.constant 0 : index
    %c0_14 = arith.constant 0 : index
    %47 = vector.load %arg3[%c0_12, %c0_13, %c0_14] : memref<1x8x128xf32, #tpu.memory_space<vmem>>, vector<1x8x128xf32>
    tpu.vector_store %arg3[%c0_12, %c0_13, %c0_14], %46 {strides = array<i32>} : memref<1x8x128xf32, #tpu.memory_space<vmem>>, vector<1x8x128xf32>,
    return
  }
  func.func @transform_0(%arg0: i32) -> (i32, i32) {
    %c0_i32 = arith.constant 0 : i32
    %c0_i32_0 = arith.constant 0 : i32
    return %arg0, %c0_i32 : i32, i32
  }
  func.func @transform_1(%arg0: i32) -> (i32, i32) {
    %c0_i32 = arith.constant 0 : i32
    %c0_i32_0 = arith.constant 0 : i32
    return %arg0, %c0_i32 : i32, i32
  }
  func.func @transform_2(%arg0: i32) -> (i32, i32, i32) {
    %c0_i32 = arith.constant 0 : i32
    %c0_i32_0 = arith.constant 0 : i32
    %c0_i32_1 = arith.constant 0 : i32
    return %arg0, %c0_i32, %c0_i32_0 : i32, i32, i32
  }
}

</mosaic_0001>

<llo_original>
// kernel: tpu_custom_call.1
$region0: #{tpu_custom_call.1}
  #allocation0 [shape = 'u32[]', space=smem, size = 0x4, offset = 0x4, fixed_abs, tag = 'smem constant byte address 0x4 - core index']
  #allocation1 [shape = 'u32[144,128]{1,0:T(1,128)}', space=vmem, size = 0x12000, scoped, tag = 'internal scratch']
  %s0 = inlined_call_operand.hbm [shape: f32[8,32], index: 0, kind: input, shape index: {}]
  %s1 = inlined_call_operand.hbm [shape: f32[8,32], index: 1, kind: input, shape index: {}]
  %s2 = inlined_call_operand.hbm [shape: f32[1,8,128], index: 2, kind: output, shape index: {}]
  %s3 = sld [smem:[#allocation0]]
  $region26: #{tpu_custom_call.1} parent=0
    _
  %s5 = ssub.s32 1, %s3
  %s6 = scalar_select 0, %s5, %s3
  $region1: #{tpu_custom_call.1} parent=0
    #allocation2 [shape = 'u8[4096]{0}', space=vmem, size = 0x1000, scoped, tag = 'input window, operand 0, single buffered']
    #allocation3 [shape = 's32[1]{0}', space=sflag, size = 0x4, scoped, tag = 'scoped memory for tpu_custom_call.1']
    #allocation4 [shape = 's32[1]{0}', space=sflag, size = 0x4, scoped, tag = 'scoped memory for tpu_custom_call.1']
    #allocation5 [shape = 'u8[4096]{0}', space=vmem, size = 0x1000, scoped, tag = 'input window, operand 1, single buffered']
    #allocation6 [shape = 's32[1]{0}', space=sflag, size = 0x4, scoped, tag = 'scoped memory for tpu_custom_call.1']
    #allocation7 [shape = 'u8[4096]{0}', space=vmem, size = 0x1000, scoped, tag = 'output window, operand 0, single buffered']
    %7 = vsyncpa [#allocation3], 0
    %8 = vsyncpa [#allocation6], 0
    %9 = vsyncpa [#allocation4], 0
    // Predicated region
    $region2: #{tpu_custom_call.1} parent=1 // pred_check
      _
    $region3: #{tpu_custom_call.1} parent=1 // pred_check_branch
      %11 = sbr.rel (0) target = $region5
    $region4: #{tpu_custom_call.1} parent=1 // pred_region
      %s13 = ssub.s32 128, 128
      %14 = vsyncadd [#allocation3], %s13
      %s16 = sshll.u32 [#allocation2], 4
      %s17 = int_to_ptr.vmem [resolvable:$true] %s16
      %19 = dma.hbm_to_vmem [thread:$0]  %s0, 128, %s17, [#allocation3]
    $region5: #{tpu_custom_call.1} parent=1 // pred_fallthru
      _
    // Predicated region
    $region6: #{tpu_custom_call.1} parent=1 // pred_check
      _
    $region7: #{tpu_custom_call.1} parent=1 // pred_check_branch
      %21 = sbr.rel (0) target = $region9
    $region8: #{tpu_custom_call.1} parent=1 // pred_region
      %s23 = ssub.s32 128, 128
      %24 = vsyncadd [#allocation6], %s23
      %s26 = sshll.u32 [#allocation5], 4
      %s27 = int_to_ptr.vmem [resolvable:$true] %s26
      %29 = dma.hbm_to_vmem [thread:$0]  %s1, 128, %s27, [#allocation6]
    $region9: #{tpu_custom_call.1} parent=1 // pred_fallthru
      _
    // Predicated region
    $region10: #{tpu_custom_call.1} parent=1 // pred_check
      _
    $region11: #{tpu_custom_call.1} parent=1 // pred_check_branch
      %31 = sbr.rel (0) target = $region13
    $region12: #{tpu_custom_call.1} parent=1 // pred_region
      %32 = dma.done [#allocation3], 128
    $region13: #{tpu_custom_call.1} parent=1 // pred_fallthru
      _
    // Predicated region
    $region14: #{tpu_custom_call.1} parent=1 // pred_check
      _
    $region15: #{tpu_custom_call.1} parent=1 // pred_check_branch
      %34 = sbr.rel (0) target = $region17
    $region16: #{tpu_custom_call.1} parent=1 // pred_region
      %35 = dma.done [#allocation6], 128
    $region17: #{tpu_custom_call.1} parent=1 // pred_fallthru
      _
    %v36 = vld [vmem:[#allocation2] sm:$0xff]
    %v37 = vld [vmem:[#allocation5] sm:$0xff]
    %vm38 = vcmask 261120
    %v39 = vsel %vm38, %v37, -inf
    %40 = vmax.xlane.f32.xlu0 %v39
    %v41 = vpop.xlane.xlu0 %40
    %v42 = vsub.f32 %v37, %v41
    %v43 = vmul.f32 %v42, 1.442695
    %v44 = vpow.pop %v43
    %v45 = vsel %vm38, %v44, 0.0
    %46 = vadd.xlane.f32.xlu0 %v45
    %v47 = vpop.xlane.xlu0 %46
    %v48 = vsel %vm38, %v36, -inf
    %49 = vmax.xlane.f32.xlu0 %v48
    %v50 = vpop.xlane.xlu0 %49
    %v51 = vsub.f32 %v36, %v50
    %v52 = vmul.f32 %v51, 1.442695
    %v53 = vpow.pop %v52
    %v54 = vsel %vm38, %v53, 0.0
    %55 = vadd.xlane.f32.xlu0 %v54
    %v56 = vpop.xlane.xlu0 %55
    %v57 = vlog2.pop %v56
    %v58 = vmul.f32 %v57, 0.6931472
    %v59 = vmul.f32 %v36, %v44
    %v60 = vsel %vm38, %v59, 0.0
    %61 = vadd.xlane.f32.xlu0 %v60
    %v62 = vpop.xlane.xlu0 %61
    %v63 = vmul.f32 %v50, %v47
    %v64 = vsub.f32 %v62, %v63
    %v65 = vrcp.pop %v47
    %v66 = vmul.f32 %v64, %v65
    %v67 = vsub.f32 %v58, %v66
    %s68 = smul.u32 0, 8
    %v69 = vlaneseq
    %v70 = vshrl.u32 %v69, 7
    %v71 = vstv %s68
    %v72 = vadd.s32 %v71, %v70
    %vm73 = vcmp.lt.s32.totalorder %v72, 8
    %v74 = vsel %vm73, %v67, 0.0
    %vm75 = vcmask 7168
    %v76 = vsel %vm75, %v74, 0.0
    %77 = vadd.xlane.f32.xlu0 %v76
    %v78 = vpop.xlane.xlu0 %77
    %v79 = vrot.slane %v78, 4
    %v80 = vadd.f32 %v78, %v79
    %v81 = vrot.slane %v80, 2
    %v82 = vadd.f32 %v80, %v81
    %v83 = vrot.slane %v82, 1
    %v84 = vadd.f32 %v82, %v83
    %s85 = vtos %v84
    %v86 = vlaneseq
    %v87 = vand.u32 %v86, 127
    %vm88 = vcmp.eq.s32.totalorder %v70, 0
    %vm89 = vcmp.eq.s32.totalorder %v87, 0
    %vm90 = vmand %vm88, %vm89
    %v91 = vstv %s85
    %v92 = vsel %vm90, %v91, 0.0
    %93 = vst [vmem:[#allocation7] sm:$0xff] %v92
    // Predicated region
    $region18: #{tpu_custom_call.1} parent=1 // pred_check
      _
    $region19: #{tpu_custom_call.1} parent=1 // pred_check_branch
      %95 = sbr.rel (0) target = $region21
    $region20: #{tpu_custom_call.1} parent=1 // pred_region
      %s97 = ssub.s32 128, 128
      %98 = vsyncadd [#allocation4], %s97
      %s100 = sshll.u32 [#allocation7], 4
      %s101 = int_to_ptr.vmem [resolvable:$true] %s100
      %103 = dma.vmem_to_hbm [thread:$0]  %s101, 128, %s2, [#allocation4]
    $region21: #{tpu_custom_call.1} parent=1 // pred_fallthru
      _
    // Predicated region
    $region22: #{tpu_custom_call.1} parent=1 // pred_check
      _
    $region23: #{tpu_custom_call.1} parent=1 // pred_check_branch
      %105 = sbr.rel (0) target = $region25
    $region24: #{tpu_custom_call.1} parent=1 // pred_region
      %106 = dma.done [#allocation4], 128
    $region25: #{tpu_custom_call.1} parent=1 // pred_fallthru
      _
    %107 = vsyncpa [#allocation3], 1
    %108 = vsyncpa [#allocation6], 1
    %109 = vsyncpa [#allocation4], 1

</llo_original>
